<compile_context>
chip_gen: v5e
topology: v5e:2x2
jax: 0.10.0
libtpu: 0.0.40
codegen_flags: <defaults>
</compile_context>

<pallas_src>
import functools

import jax
import jax.numpy as jnp
from jax.experimental import pallas as pl
from jax.experimental.pallas import tpu as pltpu


def _gather_kernel(idx_ref, keys_hbm, out_hbm, sem, *, block_size,
                   num_selected, rows_per_step, num_splits):
    """Gather selected key blocks for a group of batch rows, HBM -> HBM.

    idx_ref:  (B*K,) int32 in SMEM (scalar prefetch), descending-score order.
    keys_hbm: (B, S, D) raw HBM ref (memory_space=pl.ANY).
    out_hbm:  (B, K*block_size, D) raw HBM ref (memory_space=pl.ANY).
    sem:      single shared DMA semaphore.
    """
    rg = pl.program_id(0)            # row group
    sp = pl.program_id(1)            # K-split (megacore helper on v7x)
    k_per_split = num_selected // num_splits

    # Issue every copy of this step back-to-back (all outstanding at once),
    # then wait them all. Each copy moves one (block_size, D) key block
    # straight from the keys HBM buffer into its slot in the output HBM
    # buffer — no VMEM staging, no writeback.
    copies = []
    for r in range(rows_per_step):
        b = rg * rows_per_step + r
        for kk in range(k_per_split):
            k = sp * k_per_split + kk                     # traced scalar
            blk = idx_ref[b * num_selected + k]           # scalar from SMEM
            src_start = pl.multiple_of(blk * block_size, block_size)
            dst_start = pl.multiple_of(k * block_size, block_size)
            cp = pltpu.make_async_copy(
                keys_hbm.at[b, pl.ds(src_start, block_size), :],
                out_hbm.at[b, pl.ds(dst_start, block_size), :],
                sem,                                      # shared semaphore
            )
            cp.start()
            copies.append(cp)
    for cp in copies:
        cp.wait()


def _token_selection_pallas(keys, compression_scores, block_size,
                            num_selected_blocks):
    """HBM->HBM DMA gather path."""
    B, S, D = keys.shape
    NB = S // block_size
    K = num_selected_blocks
    block_scores = compression_scores.reshape(B, NB)

    # Tiny (B, NB) reduction: let XLA fuse it. NOTE: tie-breaking for equal
    # scores may differ from torch.topk (block order only, data identical).
    top_blocks = jax.lax.top_k(block_scores, K)[1]              # (B, K)
    top_flat = top_blocks.reshape(B * K).astype(jnp.int32)      # 1-D: no SMEM pad

    # Rows per grid step: overlap DMAs across rows while keeping the static
    # unroll (rows_per_step * K copies) bounded.
    max_rows = max(1, min(8, 32 // max(K, 1)))
    rows_per_step = 1
    for r in range(min(B, max_rows), 0, -1):
        if B % r == 0:
            rows_per_step = r
            break
    num_row_groups = B // rows_per_step

    # If the batch axis alone can't feed both v7x TensorCores, split K.
    num_splits = 2 if (num_row_groups < 2 and K >= 2 and K % 2 == 0) else 1

    kernel = functools.partial(
        _gather_kernel,
        block_size=block_size,
        num_selected=K,
        rows_per_step=rows_per_step,
        num_splits=num_splits,
    )

    return pl.pallas_call(
        kernel,
        out_shape=jax.ShapeDtypeStruct((B, K * block_size, D), keys.dtype),
        grid_spec=pltpu.PrefetchScalarGridSpec(
            num_scalar_prefetch=1,
            grid=(num_row_groups, num_splits),
            in_specs=[
                pl.BlockSpec(memory_space=pl.ANY),   # keys stay in HBM
            ],
            out_specs=pl.BlockSpec(memory_space=pl.ANY),  # write HBM directly
            scratch_shapes=[pltpu.SemaphoreType.DMA],     # one shared DMA sem
        ),
        compiler_params=pltpu.CompilerParams(
            dimension_semantics=("parallel", "parallel"),  # megacore on v7x
        ),
    )(top_flat, keys)


def _token_selection_xla(keys, compression_scores, block_size,
                         num_selected_blocks):
    """Pure-XLA fallback (also the reference): take_along_axis gather."""
    B, S, D = keys.shape
    NB = S // block_size
    K = num_selected_blocks
    block_scores = compression_scores.reshape(B, NB)
    top_idx = jax.lax.top_k(block_scores, K)[1]                  # (B, K)
    keys_blocked = keys[:, :NB * block_size, :].reshape(B, NB, block_size, D)
    gathered = jnp.take_along_axis(
        keys_blocked, top_idx[:, :, None, None], axis=1)         # (B,K,bs,D)
    return gathered.reshape(B, K * block_size, D)


def token_selection(keys, compression_scores, block_size, num_selected_blocks,
                    *, prefer_pallas=None):
    """Pallas implementation of TokenSelection.forward.

    prefer_pallas: None  -> auto (size/dtype dispatch),
                   True  -> force the Pallas DMA-gather kernel,
                   False -> force the pure-XLA gather.
    """
    B, S, D = keys.shape
    NB = S // block_size
    K = num_selected_blocks
    assert NB >= 1 and K >= 1 and K <= NB, (NB, K)
    assert compression_scores.size == B * NB, (
        "compression_scores must reshape to (batch, num_blocks)")

    itemsize = jnp.dtype(keys.dtype).itemsize
    packing = max(1, 4 // itemsize)        # sublane packing: 1 f32, 2 bf16, 4 i8
    sublane_block = 8 * packing            # second-minor DMA/tile alignment
    pallas_ok = (block_size % sublane_block == 0)
    gathered_bytes = B * K * block_size * D * itemsize

    if prefer_pallas is None:
        # Tiny gathers are dominated by pallas_call launch / step overhead.
        use_pallas = pallas_ok and gathered_bytes >= (256 << 10)
    elif prefer_pallas:
        if not pallas_ok:
            raise ValueError(
                f"block_size={block_size} must be a multiple of "
                f"{sublane_block} for dtype {keys.dtype} to use the Pallas "
                f"DMA-gather path (packed-sublane alignment).")
        use_pallas = True
    else:
        use_pallas = False

    if use_pallas:
        return _token_selection_pallas(keys, compression_scores, block_size,
                                       num_selected_blocks)
    return _token_selection_xla(keys, compression_scores, block_size,
                                num_selected_blocks)


def _reference(keys, compression_scores, block_size, num_selected_blocks):
    """Pure-JAX reference mirroring the PyTorch forward."""
    return _token_selection_xla(keys, compression_scores, block_size,
                                num_selected_blocks)


if __name__ == "__main__":
    # Small shapes consistent with the module, TPU-tile friendly:
    B = 2
    block_size = 8
    num_blocks = 4
    seq_len = block_size * num_blocks      # 32
    key_dim = 128
    num_selected_blocks = 2

    rng = jax.random.PRNGKey(0)
    k_keys, k_scores = jax.random.split(rng)
    keys = jax.random.normal(k_keys, (B, seq_len, key_dim), dtype=jnp.float32)
    compression_scores = jax.random.normal(
        k_scores, (B, num_blocks), dtype=jnp.float32)

    ref = _reference(keys, compression_scores, block_size,
                     num_selected_blocks)

    # Exercise the Pallas DMA-gather kernel explicitly.
    out = token_selection(keys, compression_scores, block_size,
                          num_selected_blocks, prefer_pallas=True)
    out = jax.block_until_ready(out)

    assert out.shape == (B, num_selected_blocks * block_size, key_dim), out.shape
    assert out.dtype == keys.dtype
    assert jnp.array_equal(out, ref), "Pallas TokenSelection mismatch vs reference"

    # Auto-dispatch path (falls back to the XLA gather at this tiny size).
    out_auto = jax.block_until_ready(
        token_selection(keys, compression_scores, block_size,
                        num_selected_blocks))
    assert jnp.array_equal(out_auto, ref), "Auto-dispatch mismatch vs reference"

    print("KERNEL_OK")
</pallas_src>

<mosaic_0001>
module attributes {stable_mosaic.version = 11 : i64} {
  func.func @_gather_kernel(%arg0: i32, %arg1: i32, %arg2: memref<4xi32, #tpu.memory_space<smem>>, %arg3: memref<2x32x128xf32, #tpu.memory_space<any>>, %arg4: memref<2x16x128xf32, #tpu.memory_space<any>>, %arg5: memref<!tpu.dma_semaphore, #tpu.memory_space<semaphore_mem>>) attributes {dimension_semantics = [#tpu.dimension_semantics<parallel>, #tpu.dimension_semantics<parallel>], iteration_bounds = array<i64: 1, 2>, scalar_prefetch = 1 : i64, scratch_operands = 1 : i64, tpu.core_type = #tpu.core_type<tc>, window_params = [{}, {}]} {
    %c2_i32 = arith.constant 2 : i32
    %0 = arith.muli %arg0, %c2_i32 : i32
    %c0_i32 = arith.constant 0 : i32
    %1 = arith.addi %0, %c0_i32 : i32
    %c1_i32 = arith.constant 1 : i32
    %2 = arith.muli %arg1, %c1_i32 : i32
    %c0_i32_0 = arith.constant 0 : i32
    %3 = arith.addi %2, %c0_i32_0 : i32
    %c2_i32_1 = arith.constant 2 : i32
    %4 = arith.muli %1, %c2_i32_1 : i32
    %5 = arith.addi %4, %3 : i32
    %6 = arith.index_cast %5 : i32 to index
    %7 = memref.load %arg2[%6] : memref<4xi32, #tpu.memory_space<smem>>
    %c8_i32 = arith.constant 8 : i32
    %8 = arith.muli %7, %c8_i32 : i32
    %9 = tpu.assume_multiple %8, 8 : i32
    %c8_i32_2 = arith.constant 8 : i32
    %10 = arith.muli %3, %c8_i32_2 : i32
    %11 = tpu.assume_multiple %10, 8 : i32
    %c0_i32_3 = arith.constant 0 : i32
    %12 = tpu.memref_slice %arg3[%1, %9, %c0_i32_3] : memref<2x32x128xf32, #tpu.memory_space<any>> -> memref<1x8x128xf32, #tpu.memory_space<any>>
    %13 = tpu.memref_squeeze %12 : memref<1x8x128xf32, #tpu.memory_space<any>> -> memref<8x128xf32, #tpu.memory_space<any>>
    %c0_i32_4 = arith.constant 0 : i32
    %14 = tpu.memref_slice %arg4[%1, %11, %c0_i32_4] : memref<2x16x128xf32, #tpu.memory_space<any>> -> memref<1x8x128xf32, #tpu.memory_space<any>>
    %15 = tpu.memref_squeeze %14 : memref<1x8x128xf32, #tpu.memory_space<any>> -> memref<8x128xf32, #tpu.memory_space<any>>
    tpu.enqueue_dma source(%13 : memref<8x128xf32, #tpu.memory_space<any>>) target(%15 : memref<8x128xf32, #tpu.memory_space<any>>) target_semaphore(%arg5 : memref<!tpu.dma_semaphore, #tpu.memory_space<semaphore_mem>>)
    %c2_i32_5 = arith.constant 2 : i32
    %16 = arith.muli %arg0, %c2_i32_5 : i32
    %c1_i32_6 = arith.constant 1 : i32
    %17 = arith.addi %16, %c1_i32_6 : i32
    %c1_i32_7 = arith.constant 1 : i32
    %18 = arith.muli %arg1, %c1_i32_7 : i32
    %c0_i32_8 = arith.constant 0 : i32
    %19 = arith.addi %18, %c0_i32_8 : i32
    %c2_i32_9 = arith.constant 2 : i32
    %20 = arith.muli %17, %c2_i32_9 : i32
    %21 = arith.addi %20, %19 : i32
    %22 = arith.index_cast %21 : i32 to index
    %23 = memref.load %arg2[%22] : memref<4xi32, #tpu.memory_space<smem>>
    %c8_i32_10 = arith.constant 8 : i32
    %24 = arith.muli %23, %c8_i32_10 : i32
    %25 = tpu.assume_multiple %24, 8 : i32
    %c8_i32_11 = arith.constant 8 : i32
    %26 = arith.muli %19, %c8_i32_11 : i32
    %27 = tpu.assume_multiple %26, 8 : i32
    %c0_i32_12 = arith.constant 0 : i32
    %28 = tpu.memref_slice %arg3[%17, %25, %c0_i32_12] : memref<2x32x128xf32, #tpu.memory_space<any>> -> memref<1x8x128xf32, #tpu.memory_space<any>>
    %29 = tpu.memref_squeeze %28 : memref<1x8x128xf32, #tpu.memory_space<any>> -> memref<8x128xf32, #tpu.memory_space<any>>
    %c0_i32_13 = arith.constant 0 : i32
    %30 = tpu.memref_slice %arg4[%17, %27, %c0_i32_13] : memref<2x16x128xf32, #tpu.memory_space<any>> -> memref<1x8x128xf32, #tpu.memory_space<any>>
    %31 = tpu.memref_squeeze %30 : memref<1x8x128xf32, #tpu.memory_space<any>> -> memref<8x128xf32, #tpu.memory_space<any>>
    tpu.enqueue_dma source(%29 : memref<8x128xf32, #tpu.memory_space<any>>) target(%31 : memref<8x128xf32, #tpu.memory_space<any>>) target_semaphore(%arg5 : memref<!tpu.dma_semaphore, #tpu.memory_space<semaphore_mem>>)
    %c0_i32_14 = arith.constant 0 : i32
    %32 = tpu.memref_slice %arg3[%1, %9, %c0_i32_14] : memref<2x32x128xf32, #tpu.memory_space<any>> -> memref<1x8x128xf32, #tpu.memory_space<any>>
    %33 = tpu.memref_squeeze %32 : memref<1x8x128xf32, #tpu.memory_space<any>> -> memref<8x128xf32, #tpu.memory_space<any>>
    %c0_i32_15 = arith.constant 0 : i32
    %34 = tpu.memref_slice %arg4[%1, %11, %c0_i32_15] : memref<2x16x128xf32, #tpu.memory_space<any>> -> memref<1x8x128xf32, #tpu.memory_space<any>>
    %35 = tpu.memref_squeeze %34 : memref<1x8x128xf32, #tpu.memory_space<any>> -> memref<8x128xf32, #tpu.memory_space<any>>
    tpu.wait_dma2 semaphore(%arg5 : memref<!tpu.dma_semaphore, #tpu.memory_space<semaphore_mem>>) src(%33 : memref<8x128xf32, #tpu.memory_space<any>>) dst(%35 : memref<8x128xf32, #tpu.memory_space<any>>)
    %c0_i32_16 = arith.constant 0 : i32
    %36 = tpu.memref_slice %arg3[%17, %25, %c0_i32_16] : memref<2x32x128xf32, #tpu.memory_space<any>> -> memref<1x8x128xf32, #tpu.memory_space<any>>
    %37 = tpu.memref_squeeze %36 : memref<1x8x128xf32, #tpu.memory_space<any>> -> memref<8x128xf32, #tpu.memory_space<any>>
    %c0_i32_17 = arith.constant 0 : i32
    %38 = tpu.memref_slice %arg4[%17, %27, %c0_i32_17] : memref<2x16x128xf32, #tpu.memory_space<any>> -> memref<1x8x128xf32, #tpu.memory_space<any>>
    %39 = tpu.memref_squeeze %38 : memref<1x8x128xf32, #tpu.memory_space<any>> -> memref<8x128xf32, #tpu.memory_space<any>>
    tpu.wait_dma2 semaphore(%arg5 : memref<!tpu.dma_semaphore, #tpu.memory_space<semaphore_mem>>) src(%37 : memref<8x128xf32, #tpu.memory_space<any>>) dst(%39 : memref<8x128xf32, #tpu.memory_space<any>>)
    return
  }
}

</mosaic_0001>

<llo_original>
// kernel: tpu_custom_call.1
$region0: #{tpu_custom_call.1}
  #allocation0 [shape = 'u32[]', space=smem, size = 0x4, offset = 0x4, fixed_abs, tag = 'smem constant byte address 0x4 - core index']
  #allocation1 [shape = 'u32[72,128]{1,0:T(1,128)}', space=vmem, size = 0x9000, scoped, tag = 'internal scratch']
  #allocation2 [shape = 's32[1]{0}', space=sflag, size = 0x4, scoped, tag = 'scratch operand']
  #allocation3 [shape = 's32[1]{0}', space=sflag, size = 0x4, scoped, tag = 'scoped memory for tpu_custom_call.1']
  #allocation4 [shape = 'u8[512]{0}', space=smem, size = 0x200, scoped, tag = 'prefetched SMEM operand 0']
  #allocation5 [shape = 's32[]', space=sflag, size = 0x4, offset = 0, fixed_abs, tag = 'sflag constant byte address 0x0 - dummy sync flag']
  #allocation6 [shape = 'u32[0]{0}', space=smem, size = 0, offset = 0, fixed_abs, tag = 'smem constant byte address 0x0 - null']
  #allocation7 [shape = 's32[]', space=sflag, size = 0x4, offset = 0, fixed_abs, tag = 'sflag constant byte address 0x0 - dummy sync flag']
  #allocation8 [shape = 'u32[0]{0}', space=smem, size = 0, offset = 0, fixed_abs, tag = 'smem constant byte address 0x0 - null']
  %s0 = inlined_call_operand.hbm [shape: s32[4], index: 0, kind: input, shape index: {}]
  %s1 = inlined_call_operand.hbm [shape: f32[2,32,128], index: 1, kind: input, shape index: {}]
  %s2 = inlined_call_operand.hbm [shape: f32[2,16,128], index: 2, kind: output, shape index: {}]
  %s3 = sld [smem:[#allocation0]]
  $region9: #{tpu_custom_call.1} parent=0
    _
  %s5 = ssub.s32 1, %s3
  %s6 = scalar_select 0, %s5, %s3
  %s8 = sshll.u32 %s0, 4
  %s9 = int_to_ptr.hbm [resolvable:$true] %s8
  %11 = dma.hbm_to_smem %s9, 16, [#allocation4], [#allocation3]
  %13 = dma.done [#allocation3], 16
  %14 = sfence
  loop: start=0, step=1, limit=2
  $region2: #{tpu_custom_call.1} parent=0 // loop_pre_header
    _
  $region3: #{tpu_custom_call.1} parent=0 // loop_header
    %s16 = sphi 0, %s20
    %p17 = scmp.ge.s32.totalorder %s16, 2
    %s21 = sphi 0, %s29
    %s22 = sphi 0, %s25
  $region4: #{tpu_custom_call.1} parent=0 // loop_header_branch
    %19 = sbr.rel (%p17) target = $region8
  $region5: #{tpu_custom_call.1} parent=0 // loop_body
    %s23 = sadd.s32 1, %s22
    %p24 = scmp.ge.s32.totalorder %s23, 2
    %s25 = scalar_select %p24, 0, %s23
    %s26 = sadd.s32 1, %s21
    %s27 = scalar_select %p24, %s26, %s21
    %p28 = scmp.ge.s32.totalorder %s27, 1
    %s29 = scalar_select %p28, 0, %s27
    %s30 = smul.u32 %s21, 2
    %s31 = smul.u32 %s21, 4
    %s32 = sadd.s32 %s31, %s22
    %s33 = sld [smem:[#allocation4 + %s32]]
    %s34 = smul.u32 %s33, 8
    %s35 = smul.u32 %s22, 8
    %s36 = smul.u32 %s30, 32
    %s37 = sadd.s32 %s34, %s36
    %s38 = scalar_lea.hbm %s1, %s37
    %s39 = smul.u32 %s30, 16
    %s40 = sadd.s32 %s35, %s39
    %s41 = scalar_lea.hbm %s2, %s40
    %s43 = sshll.u32 1, 14
    %s44 = sxor.u32 4294967295, %s43
    %s46 = sshll.u32 %s38, 4
    %s47 = int_to_ptr.hbm [resolvable:$true] %s46
    %s48 = sshll.u32 %s41, 4
    %s49 = int_to_ptr.hbm [resolvable:$true] %s48
    %52 = dma.general %s47, 128, %s49, [#allocation2], [#allocation5], [#allocation6], 0, 0
    %s53 = sadd.s32 %s30, 1
    %s54 = smul.u32 %s53, 2
    %s55 = sadd.s32 %s54, %s22
    %s56 = sld [smem:[#allocation4 + %s55]]
    %s57 = smul.u32 %s56, 8
    %s58 = smul.u32 %s53, 32
    %s59 = sadd.s32 %s57, %s58
    %s60 = scalar_lea.hbm %s1, %s59
    %s61 = smul.u32 %s53, 16
    %s62 = sadd.s32 %s35, %s61
    %s63 = scalar_lea.hbm %s2, %s62
    %s65 = sshll.u32 1, 14
    %s66 = sxor.u32 4294967295, %s65
    %s68 = sshll.u32 %s60, 4
    %s69 = int_to_ptr.hbm [resolvable:$true] %s68
    %s70 = sshll.u32 %s63, 4
    %s71 = int_to_ptr.hbm [resolvable:$true] %s70
    %74 = dma.general %s69, 128, %s71, [#allocation2], [#allocation7], [#allocation8], 0, 0
    %s75 = smul.u32 8, 1
    %s76 = sshll.u32 %s75, 4
    %77 = dma.done [#allocation2], %s76
    %s78 = sshll.u32 %s75, 4
    %79 = dma.done [#allocation2], %s78
  $region6: #{tpu_custom_call.1} parent=0 // loop_footer
    %s20 = sadd.s32 1, %s16
  $region7: #{tpu_custom_call.1} parent=0 // loop_footer_branch
    %15 = sbr.rel target = $region3
  $region8: #{tpu_custom_call.1} parent=0 // loop_exit
    _
  %80 = vsyncmov [#allocation2]
  %s81 = vpop.sfrf %80
  %p82 = scmp.eq.s32.totalorder %s81, 0
  %p83 = pneg %p82
  %85 = shalt.err (%p83)

</llo_original>
